<compile_context>
chip_gen: v7x
topology: tpu7x:2x2x1
jax: 0.10.0
libtpu: 0.0.40
codegen_flags: <defaults>
</compile_context>

<pallas_src>
import jax
import jax.numpy as jnp
from jax import lax
from jax.experimental import pallas as pl
from jax.experimental.pallas import tpu as pltpu

_BINARY_THRESHOLD = 0.01
_TARGET_BLOCK_BYTES = 2 << 20     # ~2 MiB per f32 plane-block
_VMEM_LIMIT_BYTES = 40 << 20      # 6 planes x 2 buffers x 2 MiB = 24 MiB << 40 MiB


# ---------------------------------------------------------------------------
# Kernels
# ---------------------------------------------------------------------------
def _binary_clip_mul_kernel(wr_ref, wi_ref, xr_ref, xi_ref, or_ref, oi_ref):
    """Fused _clip_weights + complex multiply: out = (w/|w|) * 1_{|w|>0.01} * x."""
    wr = wr_ref[...]
    wi = wi_ref[...]
    xr = xr_ref[...]
    xi = xi_ref[...]

    aw = jnp.sqrt(wr * wr + wi * wi)                      # |w|
    # torch: |(clamp(|w|, 0.01) - 0.01) / (|w| - 0.01)| == 1_{|w| > 0.01}
    bmap = jnp.where(aw > jnp.float32(_BINARY_THRESHOLD),
                     jnp.float32(1.0), jnp.float32(0.0))
    tr = (wr / aw) * bmap                                 # phase-only weight
    ti = (wi / aw) * bmap

    # transmission * x  (complex multiply)
    or_ref[...] = tr * xr - ti * xi
    oi_ref[...] = tr * xi + ti * xr


def _complex_mul_kernel(ar_ref, ai_ref, br_ref, bi_ref, or_ref, oi_ref):
    """Elementwise complex multiply on real/imag float32 planes."""
    ar = ar_ref[...]
    ai = ai_ref[...]
    br = br_ref[...]
    bi = bi_ref[...]
    or_ref[...] = ar * br - ai * bi
    oi_ref[...] = ar * bi + ai * br


# ---------------------------------------------------------------------------
# Wrappers
# ---------------------------------------------------------------------------
def _lane_dense_2d(shape):
    """Pick a lane-dense 2-D layout for a purely elementwise op."""
    rows, cols = int(shape[-2]), int(shape[-1])
    if cols % 128 == 0:
        return rows, cols                       # already lane dense
    total = rows * cols
    if total % 128 == 0:
        return total // 128, 128                # flatten to 128-wide lanes
    return rows, cols                           # fall back: full-extent cols block


def _pick_block_rows(n_rows: int, n_cols: int,
                     bytes_per_elem: int = 4,
                     target_bytes: int = _TARGET_BLOCK_BYTES) -> int:
    """Largest row-tile (multiple of 8, dividing n_rows) up to ~target_bytes."""
    target_rows = max(8, target_bytes // (bytes_per_elem * max(n_cols, 1)))
    if n_rows <= target_rows:
        return n_rows
    best = 0
    r = 8
    while r <= target_rows:
        if n_rows % r == 0:
            best = r
        r += 8
    return best if best > 0 else n_rows


def _run_elementwise_complex(kernel, a_r, a_i, b_r, b_i):
    """Run a 4-in / 2-out elementwise kernel over lane-dense row blocks."""
    orig_shape = a_r.shape
    rows, cols = _lane_dense_2d(orig_shape)
    if (rows, cols) != tuple(orig_shape):
        a_r, a_i, b_r, b_i = (v.reshape(rows, cols) for v in (a_r, a_i, b_r, b_i))

    block_rows = _pick_block_rows(rows, cols)
    spec = pl.BlockSpec((block_rows, cols), lambda i: (i, 0))

    out_r, out_i = pl.pallas_call(
        kernel,
        out_shape=(jax.ShapeDtypeStruct((rows, cols), jnp.float32),
                   jax.ShapeDtypeStruct((rows, cols), jnp.float32)),
        grid=(rows // block_rows,),
        in_specs=[spec, spec, spec, spec],
        out_specs=(spec, spec),
        compiler_params=pltpu.CompilerParams(
            dimension_semantics=("parallel",),
            vmem_limit_bytes=_VMEM_LIMIT_BYTES),
    )(a_r, a_i, b_r, b_i)

    out = lax.complex(out_r, out_i)
    if (rows, cols) != tuple(orig_shape):
        out = out.reshape(orig_shape)
    return out


def _binary_transmission_mul(weights: jax.Array, x: jax.Array) -> jax.Array:
    """Pallas: _clip_weights(weights) * x  (complex64 in / complex64 out)."""
    wr = jnp.real(weights).astype(jnp.float32)
    wi = jnp.imag(weights).astype(jnp.float32)
    xr = jnp.real(x).astype(jnp.float32)
    xi = jnp.imag(x).astype(jnp.float32)
    return _run_elementwise_complex(_binary_clip_mul_kernel, wr, wi, xr, xi)


def _pallas_complex_mul(a: jax.Array, b: jax.Array) -> jax.Array:
    """Pallas: elementwise complex multiply a * b (complex64)."""
    ar = jnp.real(a).astype(jnp.float32)
    ai = jnp.imag(a).astype(jnp.float32)
    br = jnp.real(b).astype(jnp.float32)
    bi = jnp.imag(b).astype(jnp.float32)
    return _run_elementwise_complex(_complex_mul_kernel, ar, ai, br, bi)


def _angular_spectrum_transfer(n: int, dx: float, wavelength: float,
                               distance: float) -> jax.Array:
    # TODO(synk): pyonn's propagate_complex_amplitude_map source is external;
    # this uses the standard angular-spectrum transfer function (evanescent decay).
    fx = jnp.fft.fftfreq(n, d=dx).astype(jnp.float32)
    fxx, fyy = jnp.meshgrid(fx, fx)
    arg = (1.0 / wavelength) ** 2 - fxx ** 2 - fyy ** 2
    kz = 2.0 * jnp.pi * jnp.sqrt(arg.astype(jnp.complex64))
    return jnp.exp(1j * kz * jnp.float32(distance)).astype(jnp.complex64)


def binary_amplitude_diffractive_forward(weights: jax.Array, x: jax.Array,
                                         x_coordinates: jax.Array,
                                         wavelength: float,
                                         z_coordinate: float,
                                         z_next: float) -> jax.Array:
    """Pallas TPU implementation of BinaryAmplitudeDiffractiveLayer.forward."""
    n = x.shape[-1]
    dx = float(x_coordinates[1] - x_coordinates[0])
    distance = float(z_next) - float(z_coordinate)

    # _clip_weights + elementwise complex multiply (Pallas kernel 1).
    u0 = _binary_transmission_mul(weights, x)

    # Angular-spectrum propagation.
    h = _angular_spectrum_transfer(n, dx, float(wavelength), distance)
    # TODO(synk): 2-D FFT/IFFT has no Pallas TPU equivalent; using XLA's TPU FFT.
    spectrum = jnp.fft.fft2(u0)
    spectrum = _pallas_complex_mul(spectrum, h)           # Pallas kernel 2.
    return jnp.fft.ifft2(spectrum)


# ---------------------------------------------------------------------------
# Pure-JAX reference (faithful mirror of the PyTorch op sequence)
# ---------------------------------------------------------------------------
def _reference_forward(weights, x, x_coordinates, wavelength, z_coordinate, z_next):
    aw = jnp.abs(weights)
    bmap = jnp.abs((jnp.maximum(aw, 0.01) - 0.01) / (aw - 0.01))
    t = (weights / aw) * bmap
    u0 = t * x
    n = x.shape[-1]
    dx = float(x_coordinates[1] - x_coordinates[0])
    distance = float(z_next) - float(z_coordinate)
    h = _angular_spectrum_transfer(n, dx, float(wavelength), distance)
    return jnp.fft.ifft2(jnp.fft.fft2(u0) * h)


if __name__ == "__main__":
    n_size = 32
    key = jax.random.PRNGKey(0)
    kwr, kwi, kxr, kxi = jax.random.split(key, 4)

    # Weights as in the module __init__: complex randn normalised by max |.|.
    w = lax.complex(jax.random.normal(kwr, (n_size, n_size), jnp.float32),
                    jax.random.normal(kwi, (n_size, n_size), jnp.float32))
    w = w / jnp.max(jnp.abs(w))

    # Input complex amplitude map, same shape as the weights.
    x = lax.complex(jax.random.normal(kxr, (n_size, n_size), jnp.float32),
                    jax.random.normal(kxi, (n_size, n_size), jnp.float32))

    # Physical layer parameters (arbitrary but realistic; meters).
    x_coordinates = (jnp.arange(n_size, dtype=jnp.float32) - n_size / 2) * 10e-6
    wavelength = 1.55e-6
    z_coordinate = 0.0
    z_next = 5e-3

    out = binary_amplitude_diffractive_forward(
        w, x, x_coordinates, wavelength, z_coordinate, z_next)
    out = jax.block_until_ready(out)

    ref = _reference_forward(w, x, x_coordinates, wavelength, z_coordinate, z_next)
    assert out.shape == x.shape and out.dtype == ref.dtype
    assert jnp.allclose(out, ref, atol=1e-4, rtol=1e-4), "mismatch vs reference"

    print("KERNEL_OK")
</pallas_src>

<mosaic_0001>
module attributes {stable_mosaic.version = 11 : i64} {
  func.func @_binary_clip_mul_kernel(%arg0: i32, %arg1: memref<8x128xf32, #tpu.memory_space<vmem>>, %arg2: memref<8x128xf32, #tpu.memory_space<vmem>>, %arg3: memref<8x128xf32, #tpu.memory_space<vmem>>, %arg4: memref<8x128xf32, #tpu.memory_space<vmem>>, %arg5: memref<8x128xf32, #tpu.memory_space<vmem>>, %arg6: memref<8x128xf32, #tpu.memory_space<vmem>>) attributes {dimension_semantics = [#tpu.dimension_semantics<parallel>], iteration_bounds = array<i64: 1>, scalar_prefetch = 0 : i64, scratch_operands = 0 : i64, tpu.core_type = #tpu.core_type<tc>, window_params = [{transform_indices = @transform_0, window_bounds = array<i64: 8, 128>}, {transform_indices = @transform_1, window_bounds = array<i64: 8, 128>}, {transform_indices = @transform_2, window_bounds = array<i64: 8, 128>}, {transform_indices = @transform_3, window_bounds = array<i64: 8, 128>}, {transform_indices = @transform_4, window_bounds = array<i64: 8, 128>}, {transform_indices = @transform_5, window_bounds = array<i64: 8, 128>}]} {
    %c0 = arith.constant 0 : index
    %c0_0 = arith.constant 0 : index
    %0 = vector.load %arg1[%c0, %c0_0] : memref<8x128xf32, #tpu.memory_space<vmem>>, vector<8x128xf32>
    %c0_1 = arith.constant 0 : index
    %c0_2 = arith.constant 0 : index
    %1 = vector.load %arg2[%c0_1, %c0_2] : memref<8x128xf32, #tpu.memory_space<vmem>>, vector<8x128xf32>
    %c0_3 = arith.constant 0 : index
    %c0_4 = arith.constant 0 : index
    %2 = vector.load %arg3[%c0_3, %c0_4] : memref<8x128xf32, #tpu.memory_space<vmem>>, vector<8x128xf32>
    %c0_5 = arith.constant 0 : index
    %c0_6 = arith.constant 0 : index
    %3 = vector.load %arg4[%c0_5, %c0_6] : memref<8x128xf32, #tpu.memory_space<vmem>>, vector<8x128xf32>
    %4 = arith.mulf %0, %0 : vector<8x128xf32>
    %5 = arith.mulf %1, %1 : vector<8x128xf32>
    %6 = arith.addf %4, %5 : vector<8x128xf32>
    %7 = math.sqrt %6 : vector<8x128xf32>
    %cst = arith.constant 0.00999999977 : f32
    %8 = vector.broadcast %cst : f32 to vector<8x128xf32>
    %9 = arith.cmpf ogt, %7, %8 : vector<8x128xf32>
    %cst_7 = arith.constant 1.000000e+00 : f32
    %cst_8 = arith.constant 0.000000e+00 : f32
    %10 = vector.broadcast %cst_7 : f32 to vector<8x128xf32>
    %11 = vector.broadcast %cst_8 : f32 to vector<8x128xf32>
    %12 = arith.select %9, %10, %11 : vector<8x128xi1>, vector<8x128xf32>
    %13 = arith.divf %0, %7 : vector<8x128xf32>
    %14 = arith.mulf %13, %12 : vector<8x128xf32>
    %15 = arith.divf %1, %7 : vector<8x128xf32>
    %16 = arith.mulf %15, %12 : vector<8x128xf32>
    %17 = arith.mulf %14, %2 : vector<8x128xf32>
    %18 = arith.mulf %16, %3 : vector<8x128xf32>
    %19 = arith.subf %17, %18 : vector<8x128xf32>
    %c0_9 = arith.constant 0 : index
    %c0_10 = arith.constant 0 : index
    %20 = vector.load %arg5[%c0_9, %c0_10] : memref<8x128xf32, #tpu.memory_space<vmem>>, vector<8x128xf32>
    tpu.vector_store %arg5[%c0_9, %c0_10], %19 {strides = array<i32>} : memref<8x128xf32, #tpu.memory_space<vmem>>, vector<8x128xf32>,
    %21 = arith.mulf %14, %3 : vector<8x128xf32>
    %22 = arith.mulf %16, %2 : vector<8x128xf32>
    %23 = arith.addf %21, %22 : vector<8x128xf32>
    %c0_11 = arith.constant 0 : index
    %c0_12 = arith.constant 0 : index
    %24 = vector.load %arg6[%c0_11, %c0_12] : memref<8x128xf32, #tpu.memory_space<vmem>>, vector<8x128xf32>
    tpu.vector_store %arg6[%c0_11, %c0_12], %23 {strides = array<i32>} : memref<8x128xf32, #tpu.memory_space<vmem>>, vector<8x128xf32>,
    return
  }
  func.func @transform_0(%arg0: i32) -> (i32, i32) {
    %c0_i32 = arith.constant 0 : i32
    %c0_i32_0 = arith.constant 0 : i32
    return %arg0, %c0_i32 : i32, i32
  }
  func.func @transform_1(%arg0: i32) -> (i32, i32) {
    %c0_i32 = arith.constant 0 : i32
    %c0_i32_0 = arith.constant 0 : i32
    return %arg0, %c0_i32 : i32, i32
  }
  func.func @transform_2(%arg0: i32) -> (i32, i32) {
    %c0_i32 = arith.constant 0 : i32
    %c0_i32_0 = arith.constant 0 : i32
    return %arg0, %c0_i32 : i32, i32
  }
  func.func @transform_3(%arg0: i32) -> (i32, i32) {
    %c0_i32 = arith.constant 0 : i32
    %c0_i32_0 = arith.constant 0 : i32
    return %arg0, %c0_i32 : i32, i32
  }
  func.func @transform_4(%arg0: i32) -> (i32, i32) {
    %c0_i32 = arith.constant 0 : i32
    %c0_i32_0 = arith.constant 0 : i32
    return %arg0, %c0_i32 : i32, i32
  }
  func.func @transform_5(%arg0: i32) -> (i32, i32) {
    %c0_i32 = arith.constant 0 : i32
    %c0_i32_0 = arith.constant 0 : i32
    return %arg0, %c0_i32 : i32, i32
  }
}

</mosaic_0001>

<llo_original>
// kernel: tpu_custom_call.1
$region0: #{tpu_custom_call.1}
  #allocation0 [shape = 'u32[]', space=smem, size = 0x4, offset = 0x4, fixed_abs, tag = 'smem constant byte address 0x4 - core index']
  #allocation1 [shape = 'u32[144,128]{1,0:T(1,128)}', space=vmem, size = 0x12000, scoped, tag = 'internal scratch']
  %s0 = inlined_call_operand.hbm [shape: f32[8,128], index: 0, kind: input, shape index: {}]
  %s1 = inlined_call_operand.hbm [shape: f32[8,128], index: 1, kind: input, shape index: {}]
  %s2 = inlined_call_operand.hbm [shape: f32[8,128], index: 2, kind: input, shape index: {}]
  %s3 = inlined_call_operand.vmem [shape: f32[8,128], index: 3, kind: input, shape index: {}]
  %s4 = inlined_call_operand.hbm [shape: f32[8,128], index: 4, kind: output, shape index: {0}]
  %s5 = inlined_call_operand.hbm [shape: f32[8,128], index: 5, kind: output, shape index: {1}]
  %6 = xla_tuple %s4, %s5
  %s7 = sld [smem:[#allocation0]]
  $region46: #{tpu_custom_call.1} parent=0
    _
  %s9 = ssub.s32 1, %s7
  %s10 = scalar_select 0, %s9, %s7
  $region1: #{tpu_custom_call.1} parent=0
    #allocation2 [shape = 'u8[4096]{0}', space=vmem, size = 0x1000, scoped, tag = 'input window, operand 0, single buffered']
    #allocation3 [shape = 's32[1]{0}', space=sflag, size = 0x4, scoped, tag = 'scoped memory for tpu_custom_call.1']
    #allocation4 [shape = 's32[1]{0}', space=sflag, size = 0x4, scoped, tag = 'scoped memory for tpu_custom_call.1']
    #allocation5 [shape = 'u8[4096]{0}', space=vmem, size = 0x1000, scoped, tag = 'input window, operand 1, single buffered']
    #allocation6 [shape = 's32[1]{0}', space=sflag, size = 0x4, scoped, tag = 'scoped memory for tpu_custom_call.1']
    #allocation7 [shape = 'u8[4096]{0}', space=vmem, size = 0x1000, scoped, tag = 'input window, operand 2, single buffered']
    #allocation8 [shape = 'u8[4096]{0}', space=vmem, size = 0x1000, scoped, tag = 'output window, operand 0, single buffered']
    #allocation9 [shape = 'u8[4096]{0}', space=vmem, size = 0x1000, scoped, tag = 'output window, operand 1, single buffered']
    #allocation10 [shape = 's32[1]{0}', space=sflag, size = 0x4, scoped, tag = 'scoped memory for tpu_custom_call.1']
    %11 = vsyncpa [#allocation3], 0
    %12 = vsyncpa [#allocation6], 0
    %13 = vsyncpa [#allocation4], 0
    %14 = vsyncpa [#allocation10], 0
    // Predicated region
    $region2: #{tpu_custom_call.1} parent=1 // pred_check
      _
    $region3: #{tpu_custom_call.1} parent=1 // pred_check_branch
      %16 = sbr.rel (0) target = $region5
    $region4: #{tpu_custom_call.1} parent=1 // pred_region
      %s18 = ssub.s32 128, 128
      %19 = vsyncadd [#allocation3], %s18
      %s21 = sshll.u32 [#allocation2], 4
      %s22 = int_to_ptr.vmem [resolvable:$true] %s21
      %24 = dma.hbm_to_vmem [thread:$0]  %s0, 128, %s22, [#allocation3]
    $region5: #{tpu_custom_call.1} parent=1 // pred_fallthru
      _
    // Predicated region
    $region6: #{tpu_custom_call.1} parent=1 // pred_check
      _
    $region7: #{tpu_custom_call.1} parent=1 // pred_check_branch
      %26 = sbr.rel (0) target = $region9
    $region8: #{tpu_custom_call.1} parent=1 // pred_region
      %s28 = ssub.s32 128, 128
      %29 = vsyncadd [#allocation6], %s28
      %s31 = sshll.u32 [#allocation5], 4
      %s32 = int_to_ptr.vmem [resolvable:$true] %s31
      %34 = dma.hbm_to_vmem [thread:$0]  %s1, 128, %s32, [#allocation6]
    $region9: #{tpu_custom_call.1} parent=1 // pred_fallthru
      _
    // Predicated region
    $region10: #{tpu_custom_call.1} parent=1 // pred_check
      _
    $region11: #{tpu_custom_call.1} parent=1 // pred_check_branch
      %36 = sbr.rel (0) target = $region13
    $region12: #{tpu_custom_call.1} parent=1 // pred_region
      %s38 = ssub.s32 128, 128
      %39 = vsyncadd [#allocation6], %s38
      %s41 = sshll.u32 [#allocation7], 4
      %s42 = int_to_ptr.vmem [resolvable:$true] %s41
      %44 = dma.hbm_to_vmem [thread:$0]  %s2, 128, %s42, [#allocation6]
    $region13: #{tpu_custom_call.1} parent=1 // pred_fallthru
      _
    // Predicated region
    $region14: #{tpu_custom_call.1} parent=1 // pred_check
      _
    $region15: #{tpu_custom_call.1} parent=1 // pred_check_branch
      %46 = sbr.rel (0) target = $region17
    $region16: #{tpu_custom_call.1} parent=1 // pred_region
      _
    $region17: #{tpu_custom_call.1} parent=1 // pred_fallthru
      _
    // Predicated region
    $region18: #{tpu_custom_call.1} parent=1 // pred_check
      _
    $region19: #{tpu_custom_call.1} parent=1 // pred_check_branch
      %48 = sbr.rel (0) target = $region21
    $region20: #{tpu_custom_call.1} parent=1 // pred_region
      %49 = dma.done [#allocation3], 128
    $region21: #{tpu_custom_call.1} parent=1 // pred_fallthru
      _
    // Predicated region
    $region22: #{tpu_custom_call.1} parent=1 // pred_check
      _
    $region23: #{tpu_custom_call.1} parent=1 // pred_check_branch
      %51 = sbr.rel (0) target = $region25
    $region24: #{tpu_custom_call.1} parent=1 // pred_region
      %52 = dma.done [#allocation6], 128
    $region25: #{tpu_custom_call.1} parent=1 // pred_fallthru
      _
    // Predicated region
    $region26: #{tpu_custom_call.1} parent=1 // pred_check
      _
    $region27: #{tpu_custom_call.1} parent=1 // pred_check_branch
      %54 = sbr.rel (0) target = $region29
    $region28: #{tpu_custom_call.1} parent=1 // pred_region
      %55 = dma.done [#allocation6], 128
    $region29: #{tpu_custom_call.1} parent=1 // pred_fallthru
      _
    %v56 = vld [vmem:[#allocation2] sm:$0xff]
    %v57 = vld [vmem:[#allocation5] sm:$0xff]
    %v58 = vld [vmem:[#allocation7] sm:$0xff]
    %v59 = vld [vmem:[%s3] sm:$0xff]
    %v60 = vmul.f32 %v56, %v56
    %v61 = vmul.f32 %v57, %v57
    %v62 = vadd.f32 %v60, %v61
    %v63 = vrsqrt.pop %v62
    %v64 = vmul.f32 %v62, %v63
    %vm65 = vcmp.eq.f32.partialorder %v62, inf
    %v66 = vsel %vm65, %v62, %v64
    %vm67 = vcmp.eq.f32.partialorder %v62, 0.0
    %v68 = vand.u32 %v62, 2147483648
    %v69 = vsel %vm67, %v68, %v66
    %vm70 = vcmp.gt.f32.partialorder %v69, 0.01
    %v71 = vsel %vm70, 1.0, 0.0
    %v72 = vrcp.pop %v69
    %v73 = vmul.f32 %v56, %v72
    %v74 = vmul.f32 %v73, %v71
    %v75 = vmul.f32 %v57, %v72
    %v76 = vmul.f32 %v75, %v71
    %v77 = vmul.f32 %v74, %v58
    %v78 = vmul.f32 %v76, %v59
    %v79 = vsub.f32 %v77, %v78
    %80 = vst [vmem:[#allocation8] sm:$0xff] %v79
    %v81 = vmul.f32 %v74, %v59
    %v82 = vmul.f32 %v76, %v58
    %v83 = vadd.f32 %v81, %v82
    %84 = vst [vmem:[#allocation9] sm:$0xff] %v83
    // Predicated region
    $region30: #{tpu_custom_call.1} parent=1 // pred_check
      _
    $region31: #{tpu_custom_call.1} parent=1 // pred_check_branch
      %86 = sbr.rel (0) target = $region33
    $region32: #{tpu_custom_call.1} parent=1 // pred_region
      %s88 = ssub.s32 128, 128
      %89 = vsyncadd [#allocation4], %s88
      %s91 = sshll.u32 [#allocation8], 4
      %s92 = int_to_ptr.vmem [resolvable:$true] %s91
      %94 = dma.vmem_to_hbm [thread:$0]  %s92, 128, %s4, [#allocation4]
    $region33: #{tpu_custom_call.1} parent=1 // pred_fallthru
      _
    // Predicated region
    $region34: #{tpu_custom_call.1} parent=1 // pred_check
      _
    $region35: #{tpu_custom_call.1} parent=1 // pred_check_branch
      %96 = sbr.rel (0) target = $region37
    $region36: #{tpu_custom_call.1} parent=1 // pred_region
      %s98 = ssub.s32 128, 128
      %99 = vsyncadd [#allocation10], %s98
      %s101 = sshll.u32 [#allocation9], 4
      %s102 = int_to_ptr.vmem [resolvable:$true] %s101
      %104 = dma.vmem_to_hbm [thread:$0]  %s102, 128, %s5, [#allocation10]
    $region37: #{tpu_custom_call.1} parent=1 // pred_fallthru
      _
    // Predicated region
    $region38: #{tpu_custom_call.1} parent=1 // pred_check
      _
    $region39: #{tpu_custom_call.1} parent=1 // pred_check_branch
      %106 = sbr.rel (0) target = $region41
    $region40: #{tpu_custom_call.1} parent=1 // pred_region
      %107 = dma.done [#allocation4], 128
    $region41: #{tpu_custom_call.1} parent=1 // pred_fallthru
      _
    // Predicated region
    $region42: #{tpu_custom_call.1} parent=1 // pred_check
      _
    $region43: #{tpu_custom_call.1} parent=1 // pred_check_branch
      %109 = sbr.rel (0) target = $region45
    $region44: #{tpu_custom_call.1} parent=1 // pred_region
      %110 = dma.done [#allocation10], 128
    $region45: #{tpu_custom_call.1} parent=1 // pred_fallthru
      _
    %111 = vsyncpa [#allocation3], 1
    %112 = vsyncpa [#allocation6], 1
    %113 = vsyncpa [#allocation4], 1
    %114 = vsyncpa [#allocation10], 1

</llo_original>
